<compile_context>
chip_gen: v5e
topology: v5e:2x2
jax: 0.10.0
libtpu: 0.0.40
codegen_flags: <defaults>
</compile_context>

<pallas_src>
import jax
import jax.numpy as jnp
from jax.experimental import pallas as pl
from jax.experimental.pallas import tpu as pltpu


# Double-buffered per-grid-step working-set budget (input tile + output tile).
_WORKING_SET_BYTES = 24 * 1024 * 1024
# Scoped VMEM limit handed to Mosaic (fits v5e/v6e 128 MiB and v7x 64 MiB).
_VMEM_LIMIT_BYTES = 48 * 1024 * 1024


def _round_up(v, m):
    return (v + m - 1) // m * m


def _folded_kernel(w_ref, b_ref, x_ref, o_ref):
    # w_ref: (P, L)  b_ref: (P, 1)  x_ref: (L, TN)  o_ref: (P, TN)
    acc = jnp.dot(w_ref[...], x_ref[...],
                  preferred_element_type=jnp.float32)      # MXU, f32 accumulation
    o_ref[...] = (acc + b_ref[...]).astype(o_ref.dtype)    # bias broadcast over lanes


def _natural_kernel(w_ref, b_ref, x_ref, o_ref):
    # w_ref: (P, L)  b_ref: (P, 1)  x_ref: (TB, L, C)  o_ref: (TB, P, C)
    w = w_ref[...]
    b = b_ref[...]
    for t in range(x_ref.shape[0]):                        # small static unroll (TB <= 8)
        acc = jnp.dot(w, x_ref[t], preferred_element_type=jnp.float32)  # (P, C)
        o_ref[t] = (acc + b).astype(o_ref.dtype)


def dlinear_forward(x, weight, bias):
    """DLinear forward (individual=False).

    x: [B, L, C] float32, weight: [P, L], bias: [P]  ->  out [B, P, C]
    """
    B, L, C = x.shape
    P = weight.shape[0]
    bias2d = bias.reshape(P, 1).astype(jnp.float32)

    compiler_params = pltpu.CompilerParams(
        dimension_semantics=("parallel",),                 # shards blocks across v7x TCs
        vmem_limit_bytes=_VMEM_LIMIT_BYTES)

    if C >= 128:
        # Natural-layout path: lane dim is C, stores are (mostly) dense, and no
        # wrapper transposes are needed at all.
        per_batch = 2 * 4 * (L + P) * C                    # dbl-buffered f32 x + out tile
        tb = max(1, min(_WORKING_SET_BYTES // per_batch, 8))
        if B >= 2:
            tb = max(1, min(tb, B // 2))                   # >= 2 grid blocks for v7x
        while B % tb:                                      # largest divisor of B <= tb
            tb -= 1
        grid = (B // tb,)
        return pl.pallas_call(
            _natural_kernel,
            out_shape=jax.ShapeDtypeStruct((B, P, C), x.dtype),
            grid=grid,
            in_specs=[
                pl.BlockSpec((P, L), lambda i: (0, 0)),        # weight, resident
                pl.BlockSpec((P, 1), lambda i: (0, 0)),        # bias, resident
                pl.BlockSpec((tb, L, C), lambda i: (i, 0, 0)),
            ],
            out_specs=pl.BlockSpec((tb, P, C), lambda i: (i, 0, 0)),
            compiler_params=compiler_params,
        )(weight, bias2d, x)

    # Small-channel path: fold batch into the lane (N) dimension so stores are
    # lane-dense.  Layout plumbing (XLA side): [B, L, C] -> [L, B, C] -> [L, B*C].
    N = B * C
    x2d = jnp.transpose(x, (1, 0, 2)).reshape(L, N)

    per_lane = 2 * 4 * (L + P)                             # dbl-buffered f32 x + out column
    tn_budget = max(128, (_WORKING_SET_BYTES // per_lane) // 128 * 128)
    tn_split = max(128, _round_up(pl.cdiv(N, 2), 128))     # aim for >= 2 blocks
    tn = min(tn_budget, tn_split)
    Np = _round_up(max(N, 128), tn)                        # pad to >= 128 lanes, tile-aligned
    if Np != N:
        x2d = jnp.pad(x2d, ((0, 0), (0, Np - N)))
    grid = (Np // tn,)

    out2d = pl.pallas_call(
        _folded_kernel,
        out_shape=jax.ShapeDtypeStruct((P, Np), x.dtype),
        grid=grid,
        in_specs=[
            pl.BlockSpec((P, L), lambda j: (0, 0)),        # weight, resident
            pl.BlockSpec((P, 1), lambda j: (0, 0)),        # bias, resident
            pl.BlockSpec((L, tn), lambda j: (0, j)),       # lane-dense activation columns
        ],
        out_specs=pl.BlockSpec((P, tn), lambda j: (0, j)),
        compiler_params=compiler_params,
    )(weight, bias2d, x2d)

    # [P, B*C] -> [P, B, C] -> [B, P, C]
    out2d = out2d[:, :N]
    return jnp.transpose(out2d.reshape(P, B, C), (1, 0, 2))


if __name__ == "__main__":
    key = jax.random.PRNGKey(0)

    def ref_forward(x, w, b):
        # permute -> Linear -> permute, as one einsum; f32 reference.
        return (jnp.einsum("blc,pl->bpc", x, w,
                           precision=jax.lax.Precision.HIGHEST)
                + b[None, :, None])

    def run_case(B, L, P, C, case_key):
        kx, kw, kb = jax.random.split(case_key, 3)
        x = jax.random.normal(kx, (B, L, C), dtype=jnp.float32)
        bound = 1.0 / (L ** 0.5)
        w = jax.random.uniform(kw, (P, L), jnp.float32, minval=-bound, maxval=bound)
        b = jax.random.uniform(kb, (P,), jnp.float32, minval=-bound, maxval=bound)
        out = jax.block_until_ready(dlinear_forward(x, w, b))
        ref = ref_forward(x, w, b)
        assert out.shape == (B, P, C)
        assert jnp.allclose(out, ref, atol=1e-4, rtol=1e-4), (
            f"mismatch vs reference (B={B}, L={L}, P={P}, C={C})")

    k1, k2 = jax.random.split(key)
    # Folded (small-channel) path: module-consistent demo shapes
    # batch=2, seq_len=16, pred_len=8, enc_in=32, individual=False.
    run_case(B=2, L=16, P=8, C=32, case_key=k1)
    # Natural-layout path (C >= 128): exercises the transpose-free branch.
    run_case(B=2, L=16, P=8, C=128, case_key=k2)

    print("KERNEL_OK")
</pallas_src>

<mosaic_0001>
module attributes {stable_mosaic.version = 11 : i64} {
  func.func @_folded_kernel(%arg0: i32, %arg1: memref<8x16xf32, #tpu.memory_space<vmem>>, %arg2: memref<8x1xf32, #tpu.memory_space<vmem>>, %arg3: memref<16x128xf32, #tpu.memory_space<vmem>>, %arg4: memref<8x128xf32, #tpu.memory_space<vmem>>) attributes {dimension_semantics = [#tpu.dimension_semantics<parallel>], iteration_bounds = array<i64: 1>, scalar_prefetch = 0 : i64, scratch_operands = 0 : i64, tpu.core_type = #tpu.core_type<tc>, window_params = [{pipeline_mode = #tpu.pipeline_mode<synchronous>, transform_indices = @transform_0, window_bounds = array<i64: 8, 16>}, {pipeline_mode = #tpu.pipeline_mode<synchronous>, transform_indices = @transform_1, window_bounds = array<i64: 8, 1>}, {transform_indices = @transform_2, window_bounds = array<i64: 16, 128>}, {transform_indices = @transform_3, window_bounds = array<i64: 8, 128>}]} {
    %c0 = arith.constant 0 : index
    %c0_0 = arith.constant 0 : index
    %0 = vector.load %arg1[%c0, %c0_0] : memref<8x16xf32, #tpu.memory_space<vmem>>, vector<8x16xf32>
    %c0_1 = arith.constant 0 : index
    %c0_2 = arith.constant 0 : index
    %1 = vector.load %arg3[%c0_1, %c0_2] : memref<16x128xf32, #tpu.memory_space<vmem>>, vector<16x128xf32>
    %cst = arith.constant dense<0.000000e+00> : vector<8x128xf32>
    %2 = tpu.matmul %0, %1, %cst {dimension_numbers = #tpu.dot_dimension_numbers<[1], [0], [0], [1], [0, 0, 1, 1], [], []>} : vector<8x16xf32>, vector<16x128xf32>, vector<8x128xf32> -> vector<8x128xf32>
    %c0_3 = arith.constant 0 : index
    %c0_4 = arith.constant 0 : index
    %3 = vector.load %arg2[%c0_3, %c0_4] : memref<8x1xf32, #tpu.memory_space<vmem>>, vector<8x1xf32>
    %4 = vector.broadcast %3 : vector<8x1xf32> to vector<8x128xf32>
    %5 = arith.addf %2, %4 : vector<8x128xf32>
    %c0_5 = arith.constant 0 : index
    %c0_6 = arith.constant 0 : index
    %6 = vector.load %arg4[%c0_5, %c0_6] : memref<8x128xf32, #tpu.memory_space<vmem>>, vector<8x128xf32>
    tpu.vector_store %arg4[%c0_5, %c0_6], %5 {strides = array<i32>} : memref<8x128xf32, #tpu.memory_space<vmem>>, vector<8x128xf32>,
    return
  }
  func.func @transform_0(%arg0: i32) -> (i32, i32) {
    %c0_i32 = arith.constant 0 : i32
    %c0_i32_0 = arith.constant 0 : i32
    %c0_i32_1 = arith.constant 0 : i32
    return %c0_i32, %c0_i32_0 : i32, i32
  }
  func.func @transform_1(%arg0: i32) -> (i32, i32) {
    %c0_i32 = arith.constant 0 : i32
    %c0_i32_0 = arith.constant 0 : i32
    %c0_i32_1 = arith.constant 0 : i32
    return %c0_i32, %c0_i32_0 : i32, i32
  }
  func.func @transform_2(%arg0: i32) -> (i32, i32) {
    %c0_i32 = arith.constant 0 : i32
    %c0_i32_0 = arith.constant 0 : i32
    return %c0_i32, %arg0 : i32, i32
  }
  func.func @transform_3(%arg0: i32) -> (i32, i32) {
    %c0_i32 = arith.constant 0 : i32
    %c0_i32_0 = arith.constant 0 : i32
    return %c0_i32, %arg0 : i32, i32
  }
}

</mosaic_0001>

<llo_original>
// kernel: tpu_custom_call.1
$region0: #{tpu_custom_call.1}
  #allocation0 [shape = 'u32[]', space=smem, size = 0x4, offset = 0x4, fixed_abs, tag = 'smem constant byte address 0x4 - core index']
  #allocation1 [shape = 'u32[72,128]{1,0:T(1,128)}', space=vmem, size = 0x9000, scoped, tag = 'internal scratch']
  %s0 = inlined_call_operand.vmem [shape: f32[8,16], index: 0, kind: input, shape index: {}]
  %s1 = inlined_call_operand.vmem [shape: f32[8,1], index: 1, kind: input, shape index: {}]
  %s2 = inlined_call_operand.hbm [shape: f32[16,128], index: 2, kind: input, shape index: {}]
  %s3 = inlined_call_operand.hbm [shape: f32[8,128], index: 3, kind: output, shape index: {}]
  %s4 = sld [smem:[#allocation0]]
  $region26: #{tpu_custom_call.1} parent=0
    _
  %s6 = ssub.s32 1, %s4
  %s7 = scalar_select 0, %s6, %s4
  $region1: #{tpu_custom_call.1} parent=0
    #allocation2 [shape = 'u8[8192]{0}', space=vmem, size = 0x2000, scoped, tag = 'input window, operand 2, single buffered']
    #allocation3 [shape = 's32[1]{0}', space=sflag, size = 0x4, scoped, tag = 'scoped memory for tpu_custom_call.1']
    #allocation4 [shape = 's32[1]{0}', space=sflag, size = 0x4, scoped, tag = 'scoped memory for tpu_custom_call.1']
    #allocation5 [shape = 'u8[4096]{0}', space=vmem, size = 0x1000, scoped, tag = 'output window, operand 0, single buffered']
    %8 = vsyncpa [#allocation3], 0
    %9 = vsyncpa [#allocation4], 0
    // Predicated region
    $region2: #{tpu_custom_call.1} parent=1 // pred_check
      _
    $region3: #{tpu_custom_call.1} parent=1 // pred_check_branch
      %11 = sbr.rel (0) target = $region5
    $region4: #{tpu_custom_call.1} parent=1 // pred_region
      _
    $region5: #{tpu_custom_call.1} parent=1 // pred_fallthru
      _
    // Predicated region
    $region6: #{tpu_custom_call.1} parent=1 // pred_check
      _
    $region7: #{tpu_custom_call.1} parent=1 // pred_check_branch
      %13 = sbr.rel (0) target = $region9
    $region8: #{tpu_custom_call.1} parent=1 // pred_region
      _
    $region9: #{tpu_custom_call.1} parent=1 // pred_fallthru
      _
    // Predicated region
    $region10: #{tpu_custom_call.1} parent=1 // pred_check
      _
    $region11: #{tpu_custom_call.1} parent=1 // pred_check_branch
      %15 = sbr.rel (0) target = $region13
    $region12: #{tpu_custom_call.1} parent=1 // pred_region
      %17 = vsyncadd [#allocation3], 0
      %s18 = sshll.u32 %s2, 4
      %s19 = int_to_ptr.hbm [resolvable:$true] %s18
      %s20 = sshll.u32 [#allocation2], 4
      %s21 = int_to_ptr.vmem [resolvable:$true] %s20
      %26 = dma.hbm_to_vmem [thread:$0]  %s19, 256, %s21, [#allocation3], 128, 128, 8
    $region13: #{tpu_custom_call.1} parent=1 // pred_fallthru
      _
    // Predicated region
    $region14: #{tpu_custom_call.1} parent=1 // pred_check
      _
    $region15: #{tpu_custom_call.1} parent=1 // pred_check_branch
      %28 = sbr.rel (0) target = $region17
    $region16: #{tpu_custom_call.1} parent=1 // pred_region
      %30 = dma.done [#allocation3], 256
    $region17: #{tpu_custom_call.1} parent=1 // pred_fallthru
      _
    %v31 = vld [vmem:[%s0] sm:$0xff]
    %v32 = vld [vmem:[#allocation2] sm:$0xff]
    %v33 = vld [vmem:[#allocation2 + $0x8] sm:$0xff]
    %v34 = vld [vmem:[%s1] sm:$0xff]
    %36 = vset.pattern.permute.xlu0 0
    %37 = vperm.xlu0 %36, %v34
    %v38 = vpop.permute.xlu0 %37
    %vm40 = vcmask 130048
    %v42 = vsel %vm40, %v31, 0
    %44 = vmatpush.msra.mxu0 0.0
    %45 = vmatpush.msra.mxu0 0.0
    %46 = vmatpush.msra.mxu0 0.0
    %47 = vmatpush.msra.mxu0 0.0
    %48 = vmatpush.msra.mxu0 0.0
    %49 = vmatpush.msra.mxu0 0.0
    %50 = vmatpush.msra.mxu0 0.0
    %51 = vmatpush.msra.mxu0 0.0
    %52 = vmatpush.msra.mxu0 0.0
    %53 = vmatpush.msra.mxu0 0.0
    %54 = vmatpush.msra.mxu0 0.0
    %55 = vmatpush.msra.mxu0 0.0
    %56 = vmatpush.msra.mxu0 0.0
    %57 = vmatpush.msra.mxu0 0.0
    %58 = vmatpush.msra.mxu0 %v33
    %59 = vmatpush.msra.mxu0 %v32
    %60 = vmatmul.f32.gmra.mxu0 %v42
    %v61 = vpop.f32.mrf.mxu0
    %v62 = vadd.f32 %v38, %v61
    %63 = vdwg.mxu0
    %64 = vst [vmem:[#allocation5] sm:$0xff] %v62
    // Predicated region
    $region18: #{tpu_custom_call.1} parent=1 // pred_check
      _
    $region19: #{tpu_custom_call.1} parent=1 // pred_check_branch
      %66 = sbr.rel (0) target = $region21
    $region20: #{tpu_custom_call.1} parent=1 // pred_region
      %68 = vsyncadd [#allocation4], 0
      %s70 = sshll.u32 [#allocation5], 4
      %s71 = int_to_ptr.vmem [resolvable:$true] %s70
      %s72 = sshll.u32 %s3, 4
      %s73 = int_to_ptr.hbm [resolvable:$true] %s72
      %75 = dma.vmem_to_hbm [thread:$0]  %s71, 128, %s73, [#allocation4]
    $region21: #{tpu_custom_call.1} parent=1 // pred_fallthru
      _
    // Predicated region
    $region22: #{tpu_custom_call.1} parent=1 // pred_check
      _
    $region23: #{tpu_custom_call.1} parent=1 // pred_check_branch
      %77 = sbr.rel (0) target = $region25
    $region24: #{tpu_custom_call.1} parent=1 // pred_region
      %79 = dma.done [#allocation4], 128
    $region25: #{tpu_custom_call.1} parent=1 // pred_fallthru
      _
    %80 = vsyncpa [#allocation3], 1
    %81 = vsyncpa [#allocation4], 1

</llo_original>
